<compile_context>
chip_gen: v6e
topology: v6e:2x2x1
jax: 0.10.0
libtpu: 0.0.40
codegen_flags: <defaults>
</compile_context>

<pallas_src>
import jax
import jax.numpy as jnp
from jax.experimental import pallas as pl
from jax.experimental.pallas import tpu as pltpu


def fm_kernel(b_ref, w_ref, vals_ref, v_ref, r_ref, s_ref, out_ref):
    # b_ref    : (1,)       SMEM scalar bias
    # w_ref    : (TB, F)    gathered linear weights (batch-major)
    # vals_ref : (TB, F)    feature values
    # v_ref    : (TB, F*K)  gathered factor embeddings, flattened batch-major
    # r_ref    : (F, F*K)   constant 0/1 "repeat" matrix  R[f, f*K+k] = 1
    # s_ref    : (F*K, K)   constant 0/1 "selector" matrix S[f*K+k, k] = 1
    # out_ref  : (TB, 1)    fm logits
    vals = vals_ref[...].astype(jnp.float32)                        # (TB, F)
    w = w_ref[...].astype(jnp.float32)                              # (TB, F)
    v = v_ref[...].astype(jnp.float32)                              # (TB, FK)
    R = r_ref[...]                                                  # (F, FK)
    S = s_ref[...]                                                  # (FK, K)

    # Broadcast per-field values across their K columns with an MXU matmul
    # (MXU is idle in this mem-bound kernel, so this is effectively free).
    vals_rep = jnp.dot(vals, R, preferred_element_type=jnp.float32)   # (TB, FK)
    x = v * vals_rep                                                  # (TB, FK)

    # sum over fields for each factor dim k: classic FM identity pieces.
    sum_x = jnp.dot(x, S, preferred_element_type=jnp.float32)         # (TB, K)
    square_of_sum = jnp.sum(sum_x * sum_x, axis=1, keepdims=True)     # (TB, 1)
    sum_of_square = jnp.sum(x * x, axis=1, keepdims=True)             # (TB, 1)
    linear = jnp.sum(w * vals, axis=1, keepdims=True)                 # (TB, 1)

    out_ref[...] = b_ref[0] + linear + 0.5 * (square_of_sum - sum_of_square)


def factorization_machine_forward(b, w_table, v_table, indices, values, *,
                                  tb_rows=4096,
                                  v_dtype=jnp.float32,
                                  vmem_limit_bytes=32 * 1024 * 1024):
    """b: (1,) f32, w_table: (num_features, 1), v_table: (num_features, K),
    indices: (B, F) int32, values: (B, F) f32 -> (B,) f32."""
    B, F = indices.shape
    K = v_table.shape[1]
    FK = F * K

    # ---- batch-major gathers: contiguous, no HBM transpose -------------------
    # (Gather of the embedding tables is data-dependent indexing and stays in
    #  XLA; the reshape (B,F,K)->(B,F*K) is a free contiguous bitcast.)
    w_g = w_table[indices, 0].astype(jnp.float32)                       # (B, F)
    vals = values.astype(jnp.float32)                                   # (B, F)
    v_g = v_table.astype(v_dtype)[indices].reshape(B, FK)               # (B, F*K)

    # ---- constant selector matrices for the in-kernel MXU reductions ---------
    f_ids = jnp.arange(F, dtype=jnp.int32)
    j_ids = jnp.arange(FK, dtype=jnp.int32)
    k_ids = jnp.arange(K, dtype=jnp.int32)
    R = (j_ids[None, :] // K == f_ids[:, None]).astype(jnp.float32)     # (F, FK)
    S = (j_ids[:, None] % K == k_ids[None, :]).astype(jnp.float32)      # (FK, K)

    # ---- batch tiling ---------------------------------------------------------
    if B < 1024:
        # Single full-extent tile (satisfies the (8,128) rule via "equal full dim").
        TB, B_pad = B, B
    else:
        TB = max(512, min(int(tb_rows), 8192) // 512 * 512)
        # Keep >= 2 tiles so the "parallel" grid axis can feed both v7x TensorCores.
        while TB > 512 and (B + TB - 1) // TB < 2:
            TB //= 2
        B_pad = (B + TB - 1) // TB * TB

    if B_pad != B:
        pad = B_pad - B
        w_g = jnp.pad(w_g, ((0, pad), (0, 0)))
        vals = jnp.pad(vals, ((0, pad), (0, 0)))
        v_g = jnp.pad(v_g, ((0, pad), (0, 0)))

    grid = (B_pad // TB,)

    v_bytes = B_pad * FK * jnp.dtype(v_dtype).itemsize
    bytes_accessed = int(v_bytes + B_pad * (2 * F + 1) * 4 + (F * FK + FK * K) * 4 + 4)
    flops = int(B_pad * (2 * F * FK + 2 * FK * K + 4 * FK + 3 * F + 2 * K + 4))
    cost = pl.CostEstimate(flops=flops, transcendentals=0,
                           bytes_accessed=bytes_accessed)

    out = pl.pallas_call(
        fm_kernel,
        out_shape=jax.ShapeDtypeStruct((B_pad, 1), jnp.float32),
        grid=grid,
        in_specs=[
            pl.BlockSpec(memory_space=pltpu.MemorySpace.SMEM),     # bias scalar (1,)
            pl.BlockSpec((TB, F), lambda i: (i, 0)),               # w    (B_pad, F)
            pl.BlockSpec((TB, F), lambda i: (i, 0)),               # vals (B_pad, F)
            pl.BlockSpec((TB, FK), lambda i: (i, 0)),              # v    (B_pad, F*K)
            pl.BlockSpec((F, FK), lambda i: (0, 0)),               # R constant
            pl.BlockSpec((FK, K), lambda i: (0, 0)),               # S constant
        ],
        out_specs=pl.BlockSpec((TB, 1), lambda i: (i, 0)),
        compiler_params=pltpu.CompilerParams(
            dimension_semantics=("parallel",),   # shard batch tiles across TCs (v7x)
            vmem_limit_bytes=vmem_limit_bytes,
        ),
        cost_estimate=cost,
    )(b, w_g, vals, v_g, R, S)

    return out[:B, 0]   # matches torch .squeeze()


def fm_reference(b, w_table, v_table, indices, values):
    """Pure-JAX f32 reference for correctness check."""
    w_emb = w_table[indices]                                          # (B, F, 1)
    linear = b + jnp.sum(w_emb * values[:, :, None], axis=1)          # (B, 1)
    x = v_table[indices] * values[:, :, None]                         # (B, F, K)
    square_of_sum = jnp.sum(x, axis=1) ** 2
    sum_of_square = jnp.sum(x ** 2, axis=1)
    interaction = 0.5 * jnp.sum(square_of_sum - sum_of_square, axis=1, keepdims=True)
    return (linear + interaction)[:, 0]


if __name__ == "__main__":
    fwd = jax.jit(factorization_machine_forward,
                  static_argnames=("tb_rows", "v_dtype", "vmem_limit_bytes"))

    def run_case(case_id, num_features, num_fields, k, batch, *, tb_rows=4096,
                 v_dtype=jnp.float32, atol=1e-3, rtol=1e-2, mean_tol=3e-4):
        init_stddev = 0.01
        key = jax.random.fold_in(jax.random.PRNGKey(0), case_id)
        kw, kv, ki, kval = jax.random.split(key, 4)

        b = jnp.zeros((1,), dtype=jnp.float32)
        w_table = init_stddev * jax.random.normal(kw, (num_features, 1), dtype=jnp.float32)
        v_table = init_stddev * jax.random.normal(kv, (num_features, k), dtype=jnp.float32)
        indices = jax.random.randint(ki, (batch, num_fields), 0, num_features,
                                     dtype=jnp.int32)
        values = jax.random.normal(kval, (batch, num_fields), dtype=jnp.float32)

        out = fwd(b, w_table, v_table, indices, values,
                  tb_rows=tb_rows, v_dtype=v_dtype)
        out = jax.block_until_ready(out)
        ref = fm_reference(b, w_table, v_table, indices, values)

        assert out.shape == (batch,), out.shape
        err = jnp.abs(out - ref)
        assert jnp.allclose(out, ref, atol=atol, rtol=rtol), float(err.max())
        assert float(err.mean()) < mean_tol, float(err.mean())

    # 1) Tiny shapes consistent with the module defaults (single full-extent tile).
    run_case(0, num_features=32, num_fields=8, k=8, batch=8)
    # 2) Lane-dense F*K = 128 tile, non-multiple-of-8 batch, single tile.
    run_case(1, num_features=100, num_fields=16, k=8, batch=300)
    # 3) Multi-tile path: batch tiled at 512 rows with padding (1200 -> 1536, grid=(3,)).
    run_case(2, num_features=100, num_fields=16, k=8, batch=1200, tb_rows=512)
    # 4) bf16 carriage of the dominant v operand (f32 accumulation); looser tolerance.
    run_case(3, num_features=100, num_fields=16, k=8, batch=1200, tb_rows=512,
             v_dtype=jnp.bfloat16, atol=3e-3, rtol=2e-2, mean_tol=1e-3)

    print("KERNEL_OK")
</pallas_src>

<mosaic_0001>
module attributes {stable_mosaic.version = 11 : i64} {
  func.func @fm_kernel(%arg0: i32, %arg1: memref<1xf32, #tpu.memory_space<smem>>, %arg2: memref<8x8xf32, #tpu.memory_space<vmem>>, %arg3: memref<8x8xf32, #tpu.memory_space<vmem>>, %arg4: memref<8x64xf32, #tpu.memory_space<vmem>>, %arg5: memref<8x64xf32, #tpu.memory_space<vmem>>, %arg6: memref<64x8xf32, #tpu.memory_space<vmem>>, %arg7: memref<8x1xf32, #tpu.memory_space<vmem>>) attributes {dimension_semantics = [#tpu.dimension_semantics<parallel>], iteration_bounds = array<i64: 1>, scalar_prefetch = 0 : i64, scratch_operands = 0 : i64, tpu.core_type = #tpu.core_type<tc>, window_params = [{transform_indices = @transform_0, window_bounds = array<i64: 1>}, {transform_indices = @transform_1, window_bounds = array<i64: 8, 8>}, {transform_indices = @transform_2, window_bounds = array<i64: 8, 8>}, {transform_indices = @transform_3, window_bounds = array<i64: 8, 64>}, {pipeline_mode = #tpu.pipeline_mode<synchronous>, transform_indices = @transform_4, window_bounds = array<i64: 8, 64>}, {pipeline_mode = #tpu.pipeline_mode<synchronous>, transform_indices = @transform_5, window_bounds = array<i64: 64, 8>}, {transform_indices = @transform_6, window_bounds = array<i64: 8, 1>}]} {
    %c0 = arith.constant 0 : index
    %c0_0 = arith.constant 0 : index
    %0 = vector.load %arg3[%c0, %c0_0] : memref<8x8xf32, #tpu.memory_space<vmem>>, vector<8x8xf32>
    %c0_1 = arith.constant 0 : index
    %c0_2 = arith.constant 0 : index
    %1 = vector.load %arg2[%c0_1, %c0_2] : memref<8x8xf32, #tpu.memory_space<vmem>>, vector<8x8xf32>
    %c0_3 = arith.constant 0 : index
    %c0_4 = arith.constant 0 : index
    %2 = vector.load %arg4[%c0_3, %c0_4] : memref<8x64xf32, #tpu.memory_space<vmem>>, vector<8x64xf32>
    %c0_5 = arith.constant 0 : index
    %c0_6 = arith.constant 0 : index
    %3 = vector.load %arg5[%c0_5, %c0_6] : memref<8x64xf32, #tpu.memory_space<vmem>>, vector<8x64xf32>
    %c0_7 = arith.constant 0 : index
    %c0_8 = arith.constant 0 : index
    %4 = vector.load %arg6[%c0_7, %c0_8] : memref<64x8xf32, #tpu.memory_space<vmem>>, vector<64x8xf32>
    %cst = arith.constant dense<0.000000e+00> : vector<8x64xf32>
    %5 = tpu.matmul %0, %3, %cst {dimension_numbers = #tpu.dot_dimension_numbers<[1], [0], [0], [1], [0, 0, 1, 1], [], []>} : vector<8x8xf32>, vector<8x64xf32>, vector<8x64xf32> -> vector<8x64xf32>
    %6 = arith.mulf %2, %5 : vector<8x64xf32>
    %cst_9 = arith.constant dense<0.000000e+00> : vector<8x8xf32>
    %7 = tpu.matmul %6, %4, %cst_9 {dimension_numbers = #tpu.dot_dimension_numbers<[1], [0], [0], [1], [0, 0, 1, 1], [], []>} : vector<8x64xf32>, vector<64x8xf32>, vector<8x8xf32> -> vector<8x8xf32>
    %8 = arith.mulf %7, %7 : vector<8x8xf32>
    %cst_10 = arith.constant dense<0.000000e+00> : vector<8xf32>
    %9 = vector.multi_reduction <add>, %8, %cst_10 [1] : vector<8x8xf32> to vector<8xf32>
    %10 = vector.shape_cast %9 : vector<8xf32> to vector<8x1xf32>
    %11 = arith.mulf %6, %6 : vector<8x64xf32>
    %cst_11 = arith.constant dense<0.000000e+00> : vector<8xf32>
    %12 = vector.multi_reduction <add>, %11, %cst_11 [1] : vector<8x64xf32> to vector<8xf32>
    %13 = vector.shape_cast %12 : vector<8xf32> to vector<8x1xf32>
    %14 = arith.mulf %1, %0 : vector<8x8xf32>
    %cst_12 = arith.constant dense<0.000000e+00> : vector<8xf32>
    %15 = vector.multi_reduction <add>, %14, %cst_12 [1] : vector<8x8xf32> to vector<8xf32>
    %16 = vector.shape_cast %15 : vector<8xf32> to vector<8x1xf32>
    %c0_13 = arith.constant 0 : index
    %17 = memref.load %arg1[%c0_13] : memref<1xf32, #tpu.memory_space<smem>>
    %18 = vector.broadcast %17 : f32 to vector<8x1xf32>
    %19 = arith.addf %18, %16 : vector<8x1xf32>
    %20 = arith.subf %10, %13 : vector<8x1xf32>
    %cst_14 = arith.constant 5.000000e-01 : f32
    %21 = vector.broadcast %cst_14 : f32 to vector<8x1xf32>
    %22 = arith.mulf %21, %20 : vector<8x1xf32>
    %23 = arith.addf %19, %22 : vector<8x1xf32>
    %c0_15 = arith.constant 0 : index
    %c0_16 = arith.constant 0 : index
    %24 = vector.load %arg7[%c0_15, %c0_16] : memref<8x1xf32, #tpu.memory_space<vmem>>, vector<8x1xf32>
    tpu.vector_store %arg7[%c0_15, %c0_16], %23 {strides = array<i32>} : memref<8x1xf32, #tpu.memory_space<vmem>>, vector<8x1xf32>,
    return
  }
  func.func @transform_0(%arg0: i32) -> i32 {
    %c0_i32 = arith.constant 0 : i32
    %c0_i32_0 = arith.constant 0 : i32
    return %c0_i32 : i32
  }
  func.func @transform_1(%arg0: i32) -> (i32, i32) {
    %c0_i32 = arith.constant 0 : i32
    %c0_i32_0 = arith.constant 0 : i32
    return %arg0, %c0_i32 : i32, i32
  }
  func.func @transform_2(%arg0: i32) -> (i32, i32) {
    %c0_i32 = arith.constant 0 : i32
    %c0_i32_0 = arith.constant 0 : i32
    return %arg0, %c0_i32 : i32, i32
  }
  func.func @transform_3(%arg0: i32) -> (i32, i32) {
    %c0_i32 = arith.constant 0 : i32
    %c0_i32_0 = arith.constant 0 : i32
    return %arg0, %c0_i32 : i32, i32
  }
  func.func @transform_4(%arg0: i32) -> (i32, i32) {
    %c0_i32 = arith.constant 0 : i32
    %c0_i32_0 = arith.constant 0 : i32
    %c0_i32_1 = arith.constant 0 : i32
    return %c0_i32, %c0_i32_0 : i32, i32
  }
  func.func @transform_5(%arg0: i32) -> (i32, i32) {
    %c0_i32 = arith.constant 0 : i32
    %c0_i32_0 = arith.constant 0 : i32
    %c0_i32_1 = arith.constant 0 : i32
    return %c0_i32, %c0_i32_0 : i32, i32
  }
  func.func @transform_6(%arg0: i32) -> (i32, i32) {
    %c0_i32 = arith.constant 0 : i32
    %c0_i32_0 = arith.constant 0 : i32
    return %arg0, %c0_i32 : i32, i32
  }
}

</mosaic_0001>

<llo_original>
// kernel: factorization_machine_forward.1
$region0: #{factorization_machine_forward.1}
  #allocation0 [shape = 'u32[]', space=smem, size = 0x4, offset = 0x4, fixed_abs, tag = 'smem constant byte address 0x4 - core index']
  #allocation1 [shape = 'u32[144,128]{1,0:T(1,128)}', space=vmem, size = 0x12000, scoped, tag = 'internal scratch']
  #allocation2 [shape = 'f32[1]{0:T(128)S(6)}', space=smem, size = 0x200, scoped, tag = 'scoped memory for factorization_machine_forward.1']
  %s0 = inlined_call_operand.<no memory space> [shape: f32[1], index: 0, kind: input, shape index: {}]
  %s1 = inlined_call_operand.vmem [shape: f32[8,8], index: 1, kind: input, shape index: {}]
  %s2 = inlined_call_operand.vmem [shape: f32[8,8], index: 2, kind: input, shape index: {}]
  %s3 = inlined_call_operand.vmem [shape: f32[8,64], index: 3, kind: input, shape index: {}]
  %s4 = inlined_call_operand.vmem [shape: f32[8,64], index: 4, kind: input, shape index: {}]
  %s5 = inlined_call_operand.vmem [shape: f32[64,8], index: 5, kind: input, shape index: {}]
  %s6 = inlined_call_operand.vmem [shape: f32[8,1], index: 6, kind: output, shape index: {}]
  %s7 = sld [smem:[#allocation0]]
  $region34: #{factorization_machine_forward.1} parent=0
    _
  %s9 = ssub.s32 1, %s7
  %s10 = scalar_select 0, %s9, %s7
  %11 = sst [smem:[#allocation2]] %s0
  // Predicated region
  $region2: #{factorization_machine_forward.1} parent=0 // pred_check
    _
  $region3: #{factorization_machine_forward.1} parent=0 // pred_check_branch
    %13 = sbr.rel (0) target = $region5
  $region4: #{factorization_machine_forward.1} parent=0 // pred_region
    _
  $region5: #{factorization_machine_forward.1} parent=0 // pred_fallthru
    _
  // Predicated region
  $region6: #{factorization_machine_forward.1} parent=0 // pred_check
    _
  $region7: #{factorization_machine_forward.1} parent=0 // pred_check_branch
    %15 = sbr.rel (0) target = $region9
  $region8: #{factorization_machine_forward.1} parent=0 // pred_region
    _
  $region9: #{factorization_machine_forward.1} parent=0 // pred_fallthru
    _
  // Predicated region
  $region10: #{factorization_machine_forward.1} parent=0 // pred_check
    _
  $region11: #{factorization_machine_forward.1} parent=0 // pred_check_branch
    %17 = sbr.rel (0) target = $region13
  $region12: #{factorization_machine_forward.1} parent=0 // pred_region
    _
  $region13: #{factorization_machine_forward.1} parent=0 // pred_fallthru
    _
  // Predicated region
  $region14: #{factorization_machine_forward.1} parent=0 // pred_check
    _
  $region15: #{factorization_machine_forward.1} parent=0 // pred_check_branch
    %19 = sbr.rel (0) target = $region17
  $region16: #{factorization_machine_forward.1} parent=0 // pred_region
    _
  $region17: #{factorization_machine_forward.1} parent=0 // pred_fallthru
    _
  // Predicated region
  $region18: #{factorization_machine_forward.1} parent=0 // pred_check
    _
  $region19: #{factorization_machine_forward.1} parent=0 // pred_check_branch
    %21 = sbr.rel (0) target = $region21
  $region20: #{factorization_machine_forward.1} parent=0 // pred_region
    _
  $region21: #{factorization_machine_forward.1} parent=0 // pred_fallthru
    _
  // Predicated region
  $region22: #{factorization_machine_forward.1} parent=0 // pred_check
    _
  $region23: #{factorization_machine_forward.1} parent=0 // pred_check_branch
    %23 = sbr.rel (0) target = $region25
  $region24: #{factorization_machine_forward.1} parent=0 // pred_region
    _
  $region25: #{factorization_machine_forward.1} parent=0 // pred_fallthru
    _
  %v24 = vld [vmem:[%s2] sm:$0xff]
  %v25 = vld [vmem:[%s1] sm:$0xff]
  %v26 = vld [vmem:[%s3] sm:$0xff]
  %v27 = vld [vmem:[%s4] sm:$0xff]
  %v28 = vld [vmem:[%s5] sm:$0xff]
  %v29 = vld [vmem:[%s5 + $0x8] sm:$0xff]
  %v30 = vld [vmem:[%s5 + $0x10] sm:$0xff]
  %v31 = vld [vmem:[%s5 + $0x18] sm:$0xff]
  %v32 = vld [vmem:[%s5 + $0x20] sm:$0xff]
  %v33 = vld [vmem:[%s5 + $0x28] sm:$0xff]
  %v34 = vld [vmem:[%s5 + $0x30] sm:$0xff]
  %v35 = vld [vmem:[%s5 + $0x38] sm:$0xff]
  %vm36 = vcmask 64512
  %v38 = vsel %vm36, %v24, 0
  %40 = vmatprep.subr.mxu0 0.0
  %41 = vmatpush1.msra.mxu0 0.0
  %42 = vmatprep.subr.mxu0 0.0
  %43 = vmatpush1.msra.mxu0 0.0
  %44 = vmatprep.subr.mxu0 0.0
  %45 = vmatpush1.msra.mxu0 0.0
  %46 = vmatprep.subr.mxu0 0.0
  %47 = vmatpush1.msra.mxu0 0.0
  %48 = vmatprep.subr.mxu0 0.0
  %49 = vmatpush1.msra.mxu0 0.0
  %50 = vmatprep.subr.mxu0 0.0
  %51 = vmatpush1.msra.mxu0 0.0
  %52 = vmatprep.subr.mxu0 0.0
  %53 = vmatpush1.msra.mxu0 0.0
  %54 = vmatprep.subr.mxu0 0.0
  %55 = vmatpush1.msra.mxu0 0.0
  %56 = vmatprep.subr.mxu0 0.0
  %57 = vmatpush1.msra.mxu0 0.0
  %58 = vmatprep.subr.mxu0 0.0
  %59 = vmatpush1.msra.mxu0 0.0
  %60 = vmatprep.subr.mxu0 0.0
  %61 = vmatpush1.msra.mxu0 0.0
  %62 = vmatprep.subr.mxu0 0.0
  %63 = vmatpush1.msra.mxu0 0.0
  %64 = vmatprep.subr.mxu0 0.0
  %65 = vmatpush1.msra.mxu0 0.0
  %66 = vmatprep.subr.mxu0 0.0
  %67 = vmatpush1.msra.mxu0 0.0
  %68 = vmatprep.subr.mxu0 0.0
  %69 = vmatpush1.msra.mxu0 0.0
  %70 = vmatprep.subr.mxu0 0.0
  %71 = vmatpush1.msra.mxu0 %v27
  %72 = vmatprep.subr.mxu0 0.0
  %73 = vmatpush2.msra.mxu0 0.0
  %74 = vmatprep.subr.mxu0 0.0
  %75 = vmatpush2.msra.mxu0 0.0
  %76 = vmatprep.subr.mxu0 0.0
  %77 = vmatpush2.msra.mxu0 0.0
  %78 = vmatprep.subr.mxu0 0.0
  %79 = vmatpush2.msra.mxu0 0.0
  %80 = vmatprep.subr.mxu0 0.0
  %81 = vmatpush2.msra.mxu0 0.0
  %82 = vmatprep.subr.mxu0 0.0
  %83 = vmatpush2.msra.mxu0 0.0
  %84 = vmatprep.subr.mxu0 0.0
  %85 = vmatpush2.msra.mxu0 0.0
  %86 = vmatprep.subr.mxu0 0.0
  %87 = vmatpush2.msra.mxu0 0.0
  %88 = vmatprep.subr.mxu0 0.0
  %89 = vmatpush2.msra.mxu0 0.0
  %90 = vmatprep.subr.mxu0 0.0
  %91 = vmatpush2.msra.mxu0 0.0
  %92 = vmatprep.subr.mxu0 0.0
  %93 = vmatpush2.msra.mxu0 0.0
  %94 = vmatprep.subr.mxu0 0.0
  %95 = vmatpush2.msra.mxu0 0.0
  %96 = vmatprep.subr.mxu0 0.0
  %97 = vmatpush2.msra.mxu0 0.0
  %98 = vmatprep.subr.mxu0 0.0
  %99 = vmatpush2.msra.mxu0 0.0
  %100 = vmatprep.subr.mxu0 0.0
  %101 = vmatpush2.msra.mxu0 0.0
  %102 = vmatprep.subr.mxu0 0.0
  %103 = vmatpush2.msra.mxu0 0.0
  %104 = vmatprep.mubr.f32.mxu0 0.0
  %105 = vmatmul.mubr.f32.gmra.mxu0 %v38
  %v106 = vpop.f32.mrf.mxu0
  %v107 = vadd.f32 0.0, %v106
  %v108 = vpop.f32.mrf.mxu0
  %109 = vdwg.mxu0
  %v110 = vmul.f32 %v26, %v107
  %vm111 = vcmask 523264
  %v113 = vsel %vm111, %v110, 0
  %115 = vmatprep.subr.mxu0 0.0
  %116 = vmatpush1.msra.mxu0 0.0
  %117 = vmatprep.subr.mxu0 0.0
  %118 = vmatpush1.msra.mxu0 0.0
  %119 = vmatprep.subr.mxu0 0.0
  %120 = vmatpush1.msra.mxu0 0.0
  %121 = vmatprep.subr.mxu0 0.0
  %122 = vmatpush1.msra.mxu0 0.0
  %123 = vmatprep.subr.mxu0 0.0
  %124 = vmatpush1.msra.mxu0 0.0
  %125 = vmatprep.subr.mxu0 0.0
  %126 = vmatpush1.msra.mxu0 0.0
  %127 = vmatprep.subr.mxu0 0.0
  %128 = vmatpush1.msra.mxu0 0.0
  %129 = vmatprep.subr.mxu0 0.0
  %130 = vmatpush1.msra.mxu0 0.0
  %131 = vmatprep.subr.mxu0 0.0
  %132 = vmatpush1.msra.mxu0 %v35
  %133 = vmatprep.subr.mxu0 0.0
  %134 = vmatpush1.msra.mxu0 %v34
  %135 = vmatprep.subr.mxu0 0.0
  %136 = vmatpush1.msra.mxu0 %v33
  %137 = vmatprep.subr.mxu0 0.0
  %138 = vmatpush1.msra.mxu0 %v32
  %139 = vmatprep.subr.mxu0 0.0
  %140 = vmatpush1.msra.mxu0 %v31
  %141 = vmatprep.subr.mxu0 0.0
  %142 = vmatpush1.msra.mxu0 %v30
  %143 = vmatprep.subr.mxu0 0.0
  %144 = vmatpush1.msra.mxu0 %v29
  %145 = vmatprep.subr.mxu0 0.0
  %146 = vmatpush1.msra.mxu0 %v28
  %147 = vmatprep.subr.mxu0 0.0
  %148 = vmatpush2.msra.mxu0 0.0
  %149 = vmatprep.subr.mxu0 0.0
  %150 = vmatpush2.msra.mxu0 0.0
  %151 = vmatprep.subr.mxu0 0.0
  %152 = vmatpush2.msra.mxu0 0.0
  %153 = vmatprep.subr.mxu0 0.0
  %154 = vmatpush2.msra.mxu0 0.0
  %155 = vmatprep.subr.mxu0 0.0
  %156 = vmatpush2.msra.mxu0 0.0
  %157 = vmatprep.subr.mxu0 0.0
  %158 = vmatpush2.msra.mxu0 0.0
  %159 = vmatprep.subr.mxu0 0.0
  %160 = vmatpush2.msra.mxu0 0.0
  %161 = vmatprep.subr.mxu0 0.0
  %162 = vmatpush2.msra.mxu0 0.0
  %163 = vmatprep.subr.mxu0 0.0
  %164 = vmatpush2.msra.mxu0 0.0
  %165 = vmatprep.subr.mxu0 0.0
  %166 = vmatpush2.msra.mxu0 0.0
  %167 = vmatprep.subr.mxu0 0.0
  %168 = vmatpush2.msra.mxu0 0.0
  %169 = vmatprep.subr.mxu0 0.0
  %170 = vmatpush2.msra.mxu0 0.0
  %171 = vmatprep.subr.mxu0 0.0
  %172 = vmatpush2.msra.mxu0 0.0
  %173 = vmatprep.subr.mxu0 0.0
  %174 = vmatpush2.msra.mxu0 0.0
  %175 = vmatprep.subr.mxu0 0.0
  %176 = vmatpush2.msra.mxu0 0.0
  %177 = vmatprep.subr.mxu0 0.0
  %178 = vmatpush2.msra.mxu0 0.0
  %179 = vmatprep.mubr.f32.mxu0 0.0
  %180 = vmatmul.mubr.f32.gmra.mxu0 %v113
  %v181 = vpop.f32.mrf.mxu0
  %v182 = vadd.f32 0.0, %v181
  %v183 = vpop.f32.mrf.mxu0
  %184 = vdwg.mxu0
  %v185 = vmul.f32 %v182, %v182
  %v186 = vsel %vm36, %v185, 0.0
  %187 = vadd.xlane.f32.xlu0 %v186
  %v188 = vpop.xlane.xlu0 %187
  %v189 = vmul.f32 %v110, %v110
  %v190 = vsel %vm111, %v189, 0.0
  %191 = vadd.xlane.f32.xlu0 %v190
  %v192 = vpop.xlane.xlu0 %191
  %v193 = vmul.f32 %v25, %v24
  %v194 = vsel %vm36, %v193, 0.0
  %195 = vadd.xlane.f32.xlu0 %v194
  %v196 = vpop.xlane.xlu0 %195
  %s197 = sld [smem:[#allocation2]]
  %v198 = vstv %s197
  %v199 = vadd.f32 %v198, %v196
  %v200 = vsub.f32 %v188, %v192
  %v201 = vmul.f32 %v200, 0.5
  %v202 = vadd.f32 %v199, %v201
  %vm203 = vcmask 7168
  %204 = vst.msk [vmem:[%s6] sm:$0xff] %vm203, %v202
  // Predicated region
  $region26: #{factorization_machine_forward.1} parent=0 // pred_check
    _
  $region27: #{factorization_machine_forward.1} parent=0 // pred_check_branch
    %206 = sbr.rel (0) target = $region29
  $region28: #{factorization_machine_forward.1} parent=0 // pred_region
    _
  $region29: #{factorization_machine_forward.1} parent=0 // pred_fallthru
    _
  // Predicated region
  $region30: #{factorization_machine_forward.1} parent=0 // pred_check
    _
  $region31: #{factorization_machine_forward.1} parent=0 // pred_check_branch
    %208 = sbr.rel (0) target = $region33
  $region32: #{factorization_machine_forward.1} parent=0 // pred_region
    _
  $region33: #{factorization_machine_forward.1} parent=0 // pred_fallthru
    _

</llo_original>
